<compile_context>
chip_gen: v7x
topology: tpu7x:2x2x1
jax: 0.10.0
libtpu: 0.0.40
codegen_flags: <defaults>
</compile_context>

<pallas_src>
import functools

import jax
import jax.numpy as jnp
from jax.experimental import pallas as pl
from jax.experimental.pallas import tpu as pltpu

LANE = 128  # lane width; all feature/class dims are padded to this


# -----------------------------------------------------------------------------
# Fused kernel: backbone stub + adapter(+residual) + fc + cross-entropy
# -----------------------------------------------------------------------------
def _fused_kernel(x_ref, y_ref,
                  wpool_ref, bp_ref,
                  w1_ref, b1_ref,
                  w2_ref, b2_ref,
                  wfc_ref, bfc_ref,
                  adapter_ref, logits_ref):
    # --- backbone stub -------------------------------------------------------
    # TODO(synk): full Swin-Tiny (windowed attention stages) has no compact
    # Pallas equivalent here; stubbed with patch-embed + global mean pool.
    # The pooling + NCHW->patch permutation are folded into wpool, so this is
    # a single MXU matmul (no XLU sublane reduction, no transpose).
    feat = jnp.dot(x_ref[...], wpool_ref[...],
                   preferred_element_type=jnp.float32) + bp_ref[...]      # (TN,128) f32

    # --- adapter MLP + residual ---------------------------------------------
    h = jnp.dot(feat.astype(jnp.bfloat16), w1_ref[...],
                preferred_element_type=jnp.float32) + b1_ref[...]          # (TN, A)
    # TODO(synk): PyTorch nn.GELU() default is exact erf-GELU; tanh approx used
    # here (erf has no guaranteed Mosaic lowering).
    h = 0.5 * h * (1.0 + jnp.tanh(0.7978845608028654 *
                                  (h + 0.044715 * h * h * h)))
    a = jnp.dot(h.astype(jnp.bfloat16), w2_ref[...],
                preferred_element_type=jnp.float32) + b2_ref[...]          # (TN,128)

    adapter_out = feat + a                                                 # residual

    # --- final fc ------------------------------------------------------------
    logits = jnp.dot(adapter_out.astype(jnp.bfloat16), wfc_ref[...],
                     preferred_element_type=jnp.float32) + bfc_ref[...]    # (TN,128)

    # --- per-sample cross-entropy (stable log-sum-exp) ------------------------
    # Padding lanes carry a -1e9 bias -> exp() vanishes, max never picks them.
    m = jnp.max(logits, axis=-1, keepdims=True)
    lse = m + jnp.log(jnp.sum(jnp.exp(logits - m), axis=-1, keepdims=True))
    col = jax.lax.broadcasted_iota(jnp.int32, logits.shape, 1)
    label_logit = jnp.sum(jnp.where(col == y_ref[...], logits, 0.0),
                          axis=-1, keepdims=True)
    nll = lse - label_logit                                                # (TN, 1)

    # Fold per-sample NLL into the last lane of the lane-dense logits block.
    logits_out = jnp.where(col == (logits.shape[-1] - 1), nll, logits)

    adapter_ref[...] = adapter_out.astype(adapter_ref.dtype)
    logits_ref[...] = logits_out.astype(logits_ref.dtype)


# -----------------------------------------------------------------------------
# pallas_call wrapper
# -----------------------------------------------------------------------------
def _pick_batch_tile(n):
    for t in (128, 64, 32, 16, 8):
        if n % t == 0:
            return t
    return n  # block == full batch dim (always legal)


def fused_forward_pallas(x_flat, y_i32, params):
    n, pdp = x_flat.shape
    a_dim = params["w1"].shape[1]
    tn = _pick_batch_tile(n)
    grid = (n // tn,)

    batch_map = lambda i: (i, 0)
    const_map = lambda i: (0, 0)  # weights stay resident across batch tiles

    in_specs = [
        pl.BlockSpec((tn, pdp), batch_map),       # x_flat   (bf16)
        pl.BlockSpec((tn, 1), batch_map),         # labels   (int32)
        pl.BlockSpec((pdp, LANE), const_map),     # wpool    (bf16)
        pl.BlockSpec((1, LANE), const_map),       # bp
        pl.BlockSpec((LANE, a_dim), const_map),   # w1       (bf16)
        pl.BlockSpec((1, a_dim), const_map),      # b1
        pl.BlockSpec((a_dim, LANE), const_map),   # w2       (bf16)
        pl.BlockSpec((1, LANE), const_map),       # b2
        pl.BlockSpec((LANE, LANE), const_map),    # wfc      (bf16)
        pl.BlockSpec((1, LANE), const_map),       # bfc (-1e9 on pad lanes)
    ]
    out_specs = (
        pl.BlockSpec((tn, LANE), batch_map),      # adapter_out (padded)
        pl.BlockSpec((tn, LANE), batch_map),      # logits + nll lane (padded)
    )
    out_shape = (
        jax.ShapeDtypeStruct((n, LANE), jnp.float32),
        jax.ShapeDtypeStruct((n, LANE), jnp.float32),
    )

    return pl.pallas_call(
        _fused_kernel,
        out_shape=out_shape,
        grid_spec=pltpu.PrefetchScalarGridSpec(
            num_scalar_prefetch=0,
            grid=grid,
            in_specs=in_specs,
            out_specs=out_specs),
        compiler_params=pltpu.CompilerParams(
            dimension_semantics=("parallel",)),
    )(x_flat, y_i32,
      params["wpool"], params["bp"],
      params["w1"], params["b1"],
      params["w2"], params["b2"],
      params["wfc"], params["bfc"])


def _forward_impl(params, x, y_i32, *, in_features, num_classes):
    n = x.shape[0]
    # NCHW -> flat pixels; the patch permutation is baked into wpool, so this
    # reshape is layout-free. bf16 cast halves the kernel's input DMA bytes.
    x_flat = x.reshape(n, -1).astype(jnp.bfloat16)
    adapter_pad, logits_pad = fused_forward_pallas(x_flat, y_i32, params)
    adapter_out = adapter_pad[:, :in_features]
    logits = logits_pad[:, :num_classes]
    ce = jnp.mean(logits_pad[:, LANE - 1])
    return adapter_out, logits, ce


# -----------------------------------------------------------------------------
# Model (parameter setup + glue)
# -----------------------------------------------------------------------------
class StudentSwinAdapterPallas:
    """Pallas port of StudentSwinAdapter at small synthetic sizes."""

    def __init__(self, key, in_channels=4, patch=4, img_size=16,
                 in_features=32, adapter_dim=16, num_classes=10):
        assert img_size % patch == 0
        assert in_features <= LANE and num_classes < LANE  # lane 127 holds NLL
        self.in_features = in_features
        self.num_classes = num_classes

        dp = in_channels * patch * patch
        n_patches = (img_size // patch) ** 2

        ks = jax.random.split(key, 8)

        def linear(kw, kb, fan_in, fan_out):
            s = 1.0 / jnp.sqrt(jnp.float32(fan_in))
            w = jax.random.uniform(kw, (fan_in, fan_out), jnp.float32, -s, s)
            b = jax.random.uniform(kb, (1, fan_out), jnp.float32, -s, s)
            return w, b

        wp, bp = linear(ks[0], ks[1], dp, in_features)          # patch embed
        w1, b1 = linear(ks[2], ks[3], in_features, adapter_dim)  # adapter in
        w2, b2 = linear(ks[4], ks[5], adapter_dim, in_features)  # adapter out
        wfc, bfc = linear(ks[6], ks[7], in_features, num_classes)

        # Fold mean-pool-over-patches + NCHW->patch permutation into a single
        # (C*H*W, F) matrix:  feat[n,f] = sum_{c,h,w} x[n,c,h,w]*wp[(c,h%p,w%p),f]/P
        ci, hi, wi = jnp.meshgrid(jnp.arange(in_channels),
                                  jnp.arange(img_size),
                                  jnp.arange(img_size), indexing="ij")
        rows = (ci * (patch * patch) + (hi % patch) * patch + (wi % patch))
        wfull = wp[rows.reshape(-1)] / jnp.float32(n_patches)    # (C*H*W, F)

        def pad2(a, r, c, fill=0.0):
            out = jnp.full((r, c), fill, a.dtype)
            return out.at[:a.shape[0], :a.shape[1]].set(a)

        f, a_dim, c = in_features, adapter_dim, num_classes
        self.params = {
            # bf16 weights (MXU native), f32 biases, everything 128-lane padded
            "wpool": pad2(wfull, wfull.shape[0], LANE).astype(jnp.bfloat16),
            "bp": pad2(bp, 1, LANE),
            "w1": pad2(w1, LANE, a_dim).astype(jnp.bfloat16),
            "b1": b1,
            "w2": pad2(w2, a_dim, LANE).astype(jnp.bfloat16),
            "b2": pad2(b2, 1, LANE),
            "wfc": pad2(wfc, LANE, LANE).astype(jnp.bfloat16),
            "bfc": pad2(bfc, 1, LANE, fill=-1e9),  # -1e9 bias neutralizes pad lanes
        }

        self._forward = jax.jit(functools.partial(
            _forward_impl, in_features=in_features, num_classes=num_classes))

    def __call__(self, x, y=None):
        n = x.shape[0]
        if y is None:
            y_i32 = jnp.zeros((n, 1), jnp.int32)
        else:
            y_i32 = y.astype(jnp.int32).reshape(n, 1)

        adapter_out, logit, ce = self._forward(self.params, x, y_i32)
        ce_loss = ce if y is not None else None
        feature_dict = {"feat_2d": adapter_out}
        return feature_dict, logit, ce_loss


# -----------------------------------------------------------------------------
# Main
# -----------------------------------------------------------------------------
if __name__ == "__main__":
    key = jax.random.PRNGKey(0)
    k_model, k_x, k_y = jax.random.split(key, 3)

    model = StudentSwinAdapterPallas(
        k_model, in_channels=4, patch=4, img_size=16,
        in_features=32, adapter_dim=16, num_classes=10)

    # NCHW input, like the PyTorch module
    x = jax.random.normal(k_x, (2, 4, 16, 16), jnp.float32)
    y = jax.random.randint(k_y, (2,), 0, 10)

    feature_dict, logit, ce_loss = model(x, y)

    jax.block_until_ready(feature_dict["feat_2d"])
    jax.block_until_ready(logit)
    jax.block_until_ready(ce_loss)

    assert feature_dict["feat_2d"].shape == (2, 32)
    assert logit.shape == (2, 10)
    assert ce_loss.shape == ()
    assert bool(jnp.isfinite(ce_loss))

    # y=None path (no loss)
    fd2, logit2, ce2 = model(x)
    jax.block_until_ready(logit2)
    assert ce2 is None

    print("KERNEL_OK")
</pallas_src>

<mosaic_0001>
module attributes {stable_mosaic.version = 11 : i64} {
  func.func @_fused_kernel(%arg0: i32, %arg1: memref<2x1024xbf16, #tpu.memory_space<vmem>>, %arg2: memref<2x1xi32, #tpu.memory_space<vmem>>, %arg3: memref<1024x128xbf16, #tpu.memory_space<vmem>>, %arg4: memref<1x128xf32, #tpu.memory_space<vmem>>, %arg5: memref<128x16xbf16, #tpu.memory_space<vmem>>, %arg6: memref<1x16xf32, #tpu.memory_space<vmem>>, %arg7: memref<16x128xbf16, #tpu.memory_space<vmem>>, %arg8: memref<1x128xf32, #tpu.memory_space<vmem>>, %arg9: memref<128x128xbf16, #tpu.memory_space<vmem>>, %arg10: memref<1x128xf32, #tpu.memory_space<vmem>>, %arg11: memref<2x128xf32, #tpu.memory_space<vmem>>, %arg12: memref<2x128xf32, #tpu.memory_space<vmem>>) attributes {dimension_semantics = [#tpu.dimension_semantics<parallel>], iteration_bounds = array<i64: 1>, scalar_prefetch = 0 : i64, scratch_operands = 0 : i64, tpu.core_type = #tpu.core_type<tc>, window_params = [{transform_indices = @transform_0, window_bounds = array<i64: 2, 1024>}, {transform_indices = @transform_1, window_bounds = array<i64: 2, 1>}, {pipeline_mode = #tpu.pipeline_mode<synchronous>, transform_indices = @transform_2, window_bounds = array<i64: 1024, 128>}, {pipeline_mode = #tpu.pipeline_mode<synchronous>, transform_indices = @transform_3, window_bounds = array<i64: 1, 128>}, {pipeline_mode = #tpu.pipeline_mode<synchronous>, transform_indices = @transform_4, window_bounds = array<i64: 128, 16>}, {pipeline_mode = #tpu.pipeline_mode<synchronous>, transform_indices = @transform_5, window_bounds = array<i64: 1, 16>}, {pipeline_mode = #tpu.pipeline_mode<synchronous>, transform_indices = @transform_6, window_bounds = array<i64: 16, 128>}, {pipeline_mode = #tpu.pipeline_mode<synchronous>, transform_indices = @transform_7, window_bounds = array<i64: 1, 128>}, {pipeline_mode = #tpu.pipeline_mode<synchronous>, transform_indices = @transform_8, window_bounds = array<i64: 128, 128>}, {pipeline_mode = #tpu.pipeline_mode<synchronous>, transform_indices = @transform_9, window_bounds = array<i64: 1, 128>}, {transform_indices = @transform_10, window_bounds = array<i64: 2, 128>}, {transform_indices = @transform_11, window_bounds = array<i64: 2, 128>}]} {
    %c0 = arith.constant 0 : index
    %c0_0 = arith.constant 0 : index
    %0 = vector.load %arg1[%c0, %c0_0] : memref<2x1024xbf16, #tpu.memory_space<vmem>>, vector<2x1024xbf16>
    %c0_1 = arith.constant 0 : index
    %c0_2 = arith.constant 0 : index
    %1 = vector.load %arg3[%c0_1, %c0_2] : memref<1024x128xbf16, #tpu.memory_space<vmem>>, vector<1024x128xbf16>
    %cst = arith.constant dense<0.000000e+00> : vector<2x128xf32>
    %2 = tpu.matmul %0, %1, %cst {dimension_numbers = #tpu.dot_dimension_numbers<[1], [0], [0], [1], [0, 0, 1, 1], [], []>} : vector<2x1024xbf16>, vector<1024x128xbf16>, vector<2x128xf32> -> vector<2x128xf32>
    %c0_3 = arith.constant 0 : index
    %c0_4 = arith.constant 0 : index
    %3 = vector.load %arg4[%c0_3, %c0_4] : memref<1x128xf32, #tpu.memory_space<vmem>>, vector<1x128xf32>
    %4 = vector.broadcast %3 : vector<1x128xf32> to vector<2x128xf32>
    %5 = arith.addf %2, %4 : vector<2x128xf32>
    %6 = arith.truncf %5 : vector<2x128xf32> to vector<2x128xbf16>
    %c0_5 = arith.constant 0 : index
    %c0_6 = arith.constant 0 : index
    %7 = vector.load %arg5[%c0_5, %c0_6] : memref<128x16xbf16, #tpu.memory_space<vmem>>, vector<128x16xbf16>
    %cst_7 = arith.constant dense<0.000000e+00> : vector<2x16xf32>
    %8 = tpu.matmul %6, %7, %cst_7 {dimension_numbers = #tpu.dot_dimension_numbers<[1], [0], [0], [1], [0, 0, 1, 1], [], []>} : vector<2x128xbf16>, vector<128x16xbf16>, vector<2x16xf32> -> vector<2x16xf32>
    %c0_8 = arith.constant 0 : index
    %c0_9 = arith.constant 0 : index
    %9 = vector.load %arg6[%c0_8, %c0_9] : memref<1x16xf32, #tpu.memory_space<vmem>>, vector<1x16xf32>
    %10 = vector.broadcast %9 : vector<1x16xf32> to vector<2x16xf32>
    %11 = arith.addf %8, %10 : vector<2x16xf32>
    %cst_10 = arith.constant 5.000000e-01 : f32
    %12 = vector.broadcast %cst_10 : f32 to vector<2x16xf32>
    %13 = arith.mulf %12, %11 : vector<2x16xf32>
    %cst_11 = arith.constant 4.471500e-02 : f32
    %14 = vector.broadcast %cst_11 : f32 to vector<2x16xf32>
    %15 = arith.mulf %14, %11 : vector<2x16xf32>
    %16 = arith.mulf %15, %11 : vector<2x16xf32>
    %17 = arith.mulf %16, %11 : vector<2x16xf32>
    %18 = arith.addf %11, %17 : vector<2x16xf32>
    %cst_12 = arith.constant 0.797884583 : f32
    %19 = vector.broadcast %cst_12 : f32 to vector<2x16xf32>
    %20 = arith.mulf %19, %18 : vector<2x16xf32>
    %21 = math.tanh %20 : vector<2x16xf32>
    %cst_13 = arith.constant 1.000000e+00 : f32
    %22 = vector.broadcast %cst_13 : f32 to vector<2x16xf32>
    %23 = arith.addf %22, %21 : vector<2x16xf32>
    %24 = arith.mulf %13, %23 : vector<2x16xf32>
    %25 = arith.truncf %24 : vector<2x16xf32> to vector<2x16xbf16>
    %c0_14 = arith.constant 0 : index
    %c0_15 = arith.constant 0 : index
    %26 = vector.load %arg7[%c0_14, %c0_15] : memref<16x128xbf16, #tpu.memory_space<vmem>>, vector<16x128xbf16>
    %cst_16 = arith.constant dense<0.000000e+00> : vector<2x128xf32>
    %27 = tpu.matmul %25, %26, %cst_16 {dimension_numbers = #tpu.dot_dimension_numbers<[1], [0], [0], [1], [0, 0, 1, 1], [], []>} : vector<2x16xbf16>, vector<16x128xbf16>, vector<2x128xf32> -> vector<2x128xf32>
    %c0_17 = arith.constant 0 : index
    %c0_18 = arith.constant 0 : index
    %28 = vector.load %arg8[%c0_17, %c0_18] : memref<1x128xf32, #tpu.memory_space<vmem>>, vector<1x128xf32>
    %29 = vector.broadcast %28 : vector<1x128xf32> to vector<2x128xf32>
    %30 = arith.addf %27, %29 : vector<2x128xf32>
    %31 = arith.addf %5, %30 : vector<2x128xf32>
    %32 = arith.truncf %31 : vector<2x128xf32> to vector<2x128xbf16>
    %c0_19 = arith.constant 0 : index
    %c0_20 = arith.constant 0 : index
    %33 = vector.load %arg9[%c0_19, %c0_20] : memref<128x128xbf16, #tpu.memory_space<vmem>>, vector<128x128xbf16>
    %cst_21 = arith.constant dense<0.000000e+00> : vector<2x128xf32>
    %34 = tpu.matmul %32, %33, %cst_21 {dimension_numbers = #tpu.dot_dimension_numbers<[1], [0], [0], [1], [0, 0, 1, 1], [], []>} : vector<2x128xbf16>, vector<128x128xbf16>, vector<2x128xf32> -> vector<2x128xf32>
    %c0_22 = arith.constant 0 : index
    %c0_23 = arith.constant 0 : index
    %35 = vector.load %arg10[%c0_22, %c0_23] : memref<1x128xf32, #tpu.memory_space<vmem>>, vector<1x128xf32>
    %36 = vector.broadcast %35 : vector<1x128xf32> to vector<2x128xf32>
    %37 = arith.addf %34, %36 : vector<2x128xf32>
    %cst_24 = arith.constant dense<0xFF800000> : vector<2xf32>
    %38 = vector.multi_reduction <maximumf>, %37, %cst_24 [1] : vector<2x128xf32> to vector<2xf32>
    %39 = vector.shape_cast %38 : vector<2xf32> to vector<2x1xf32>
    %40 = vector.broadcast %39 : vector<2x1xf32> to vector<2x128xf32>
    %41 = arith.subf %37, %40 : vector<2x128xf32>
    %42 = math.exp %41 : vector<2x128xf32>
    %cst_25 = arith.constant dense<0.000000e+00> : vector<2xf32>
    %43 = vector.multi_reduction <add>, %42, %cst_25 [1] : vector<2x128xf32> to vector<2xf32>
    %44 = vector.shape_cast %43 : vector<2xf32> to vector<2x1xf32>
    %45 = math.log %44 : vector<2x1xf32>
    %46 = arith.addf %39, %45 : vector<2x1xf32>
    %47 = tpu.iota {dimensions = array<i32: 1>} : vector<2x128xi32>
    %c0_26 = arith.constant 0 : index
    %c0_27 = arith.constant 0 : index
    %48 = vector.load %arg2[%c0_26, %c0_27] : memref<2x1xi32, #tpu.memory_space<vmem>>, vector<2x1xi32>
    %49 = vector.broadcast %48 : vector<2x1xi32> to vector<2x128xi32>
    %50 = arith.cmpi eq, %47, %49 : vector<2x128xi32>
    %cst_28 = arith.constant 0.000000e+00 : f32
    %51 = vector.broadcast %cst_28 : f32 to vector<2x128xf32>
    %52 = arith.select %50, %37, %51 : vector<2x128xi1>, vector<2x128xf32>
    %cst_29 = arith.constant dense<0.000000e+00> : vector<2xf32>
    %53 = vector.multi_reduction <add>, %52, %cst_29 [1] : vector<2x128xf32> to vector<2xf32>
    %54 = vector.shape_cast %53 : vector<2xf32> to vector<2x1xf32>
    %55 = arith.subf %46, %54 : vector<2x1xf32>
    %c127_i32 = arith.constant 127 : i32
    %56 = vector.broadcast %c127_i32 : i32 to vector<2x128xi32>
    %57 = arith.cmpi eq, %47, %56 : vector<2x128xi32>
    %58 = vector.shape_cast %55 : vector<2x1xf32> to vector<2x1xf32>
    %59 = vector.broadcast %58 : vector<2x1xf32> to vector<2x128xf32>
    %60 = arith.select %57, %59, %37 : vector<2x128xi1>, vector<2x128xf32>
    %c0_30 = arith.constant 0 : index
    %c0_31 = arith.constant 0 : index
    %61 = vector.load %arg11[%c0_30, %c0_31] : memref<2x128xf32, #tpu.memory_space<vmem>>, vector<2x128xf32>
    tpu.vector_store %arg11[%c0_30, %c0_31], %31 {strides = array<i32>} : memref<2x128xf32, #tpu.memory_space<vmem>>, vector<2x128xf32>,
    %c0_32 = arith.constant 0 : index
    %c0_33 = arith.constant 0 : index
    %62 = vector.load %arg12[%c0_32, %c0_33] : memref<2x128xf32, #tpu.memory_space<vmem>>, vector<2x128xf32>
    tpu.vector_store %arg12[%c0_32, %c0_33], %60 {strides = array<i32>} : memref<2x128xf32, #tpu.memory_space<vmem>>, vector<2x128xf32>,
    return
  }
  func.func @transform_0(%arg0: i32) -> (i32, i32) {
    %c0_i32 = arith.constant 0 : i32
    %c0_i32_0 = arith.constant 0 : i32
    return %arg0, %c0_i32 : i32, i32
  }
  func.func @transform_1(%arg0: i32) -> (i32, i32) {
    %c0_i32 = arith.constant 0 : i32
    %c0_i32_0 = arith.constant 0 : i32
    return %arg0, %c0_i32 : i32, i32
  }
  func.func @transform_2(%arg0: i32) -> (i32, i32) {
    %c0_i32 = arith.constant 0 : i32
    %c0_i32_0 = arith.constant 0 : i32
    %c0_i32_1 = arith.constant 0 : i32
    return %c0_i32, %c0_i32_0 : i32, i32
  }
  func.func @transform_3(%arg0: i32) -> (i32, i32) {
    %c0_i32 = arith.constant 0 : i32
    %c0_i32_0 = arith.constant 0 : i32
    %c0_i32_1 = arith.constant 0 : i32
    return %c0_i32, %c0_i32_0 : i32, i32
  }
  func.func @transform_4(%arg0: i32) -> (i32, i32) {
    %c0_i32 = arith.constant 0 : i32
    %c0_i32_0 = arith.constant 0 : i32
    %c0_i32_1 = arith.constant 0 : i32
    return %c0_i32, %c0_i32_0 : i32, i32
  }
  func.func @transform_5(%arg0: i32) -> (i32, i32) {
    %c0_i32 = arith.constant 0 : i32
    %c0_i32_0 = arith.constant 0 : i32
    %c0_i32_1 = arith.constant 0 : i32
    return %c0_i32, %c0_i32_0 : i32, i32
  }
  func.func @transform_6(%arg0: i32) -> (i32, i32) {
    %c0_i32 = arith.constant 0 : i32
    %c0_i32_0 = arith.constant 0 : i32
    %c0_i32_1 = arith.constant 0 : i32
    return %c0_i32, %c0_i32_0 : i32, i32
  }
  func.func @transform_7(%arg0: i32) -> (i32, i32) {
    %c0_i32 = arith.constant 0 : i32
    %c0_i32_0 = arith.constant 0 : i32
    %c0_i32_1 = arith.constant 0 : i32
    return %c0_i32, %c0_i32_0 : i32, i32
  }
  func.func @transform_8(%arg0: i32) -> (i32, i32) {
    %c0_i32 = arith.constant 0 : i32
    %c0_i32_0 = arith.constant 0 : i32
    %c0_i32_1 = arith.constant 0 : i32
    return %c0_i32, %c0_i32_0 : i32, i32
  }
  func.func @transform_9(%arg0: i32) -> (i32, i32) {
    %c0_i32 = arith.constant 0 : i32
    %c0_i32_0 = arith.constant 0 : i32
    %c0_i32_1 = arith.constant 0 : i32
    return %c0_i32, %c0_i32_0 : i32, i32
  }
  func.func @transform_10(%arg0: i32) -> (i32, i32) {
    %c0_i32 = arith.constant 0 : i32
    %c0_i32_0 = arith.constant 0 : i32
    return %arg0, %c0_i32 : i32, i32
  }
  func.func @transform_11(%arg0: i32) -> (i32, i32) {
    %c0_i32 = arith.constant 0 : i32
    %c0_i32_0 = arith.constant 0 : i32
    return %arg0, %c0_i32 : i32, i32
  }
}

</mosaic_0001>

<llo_original>
// kernel: _forward_impl.1
$region0: #{_forward_impl.1}
  #allocation0 [shape = 'u32[]', space=smem, size = 0x4, offset = 0x4, fixed_abs, tag = 'smem constant byte address 0x4 - core index']
  #allocation1 [shape = 'u32[144,128]{1,0:T(1,128)}', space=vmem, size = 0x12000, scoped, tag = 'internal scratch']
  %s0 = inlined_call_operand.vmem [shape: bf16[2,1024], index: 0, kind: input, shape index: {}]
  %s1 = inlined_call_operand.vmem [shape: s32[2,1], index: 1, kind: input, shape index: {}]
  %s2 = inlined_call_operand.hbm [shape: bf16[1024,128], index: 2, kind: input, shape index: {}]
  %s3 = inlined_call_operand.vmem [shape: f32[1,128], index: 3, kind: input, shape index: {}]
  %s4 = inlined_call_operand.vmem [shape: bf16[128,16], index: 4, kind: input, shape index: {}]
  %s5 = inlined_call_operand.vmem [shape: f32[1,16], index: 5, kind: input, shape index: {}]
  %s6 = inlined_call_operand.vmem [shape: bf16[16,128], index: 6, kind: input, shape index: {}]
  %s7 = inlined_call_operand.vmem [shape: f32[1,128], index: 7, kind: input, shape index: {}]
  %s8 = inlined_call_operand.vmem [shape: bf16[128,128], index: 8, kind: input, shape index: {}]
  %s9 = inlined_call_operand.vmem [shape: f32[1,128], index: 9, kind: input, shape index: {}]
  %s10 = inlined_call_operand.hbm [shape: f32[2,128], index: 10, kind: output, shape index: {0}]
  %s11 = inlined_call_operand.vmem [shape: f32[2,128], index: 11, kind: output, shape index: {1}]
  %12 = xla_tuple %s10, %s11
  %s13 = sld [smem:[#allocation0]]
  $region62: #{_forward_impl.1} parent=0
    _
  %s15 = ssub.s32 1, %s13
  %s16 = scalar_select 0, %s15, %s13
  $region1: #{_forward_impl.1} parent=0
    #allocation2 [shape = 'u8[262144]{0}', space=vmem, size = 0x40000, scoped, tag = 'input window, operand 2, single buffered']
    #allocation3 [shape = 's32[1]{0}', space=sflag, size = 0x4, scoped, tag = 'scoped memory for _forward_impl.1']
    #allocation4 [shape = 's32[1]{0}', space=sflag, size = 0x4, scoped, tag = 'scoped memory for _forward_impl.1']
    #allocation5 [shape = 'u8[1024]{0}', space=vmem, size = 0x400, scoped, tag = 'output window, operand 0, single buffered']
    %17 = vsyncpa [#allocation3], 0
    %18 = vsyncpa [#allocation4], 0
    // Predicated region
    $region2: #{_forward_impl.1} parent=1 // pred_check
      _
    $region3: #{_forward_impl.1} parent=1 // pred_check_branch
      %20 = sbr.rel (0) target = $region5
    $region4: #{_forward_impl.1} parent=1 // pred_region
      _
    $region5: #{_forward_impl.1} parent=1 // pred_fallthru
      _
    // Predicated region
    $region6: #{_forward_impl.1} parent=1 // pred_check
      _
    $region7: #{_forward_impl.1} parent=1 // pred_check_branch
      %22 = sbr.rel (0) target = $region9
    $region8: #{_forward_impl.1} parent=1 // pred_region
      _
    $region9: #{_forward_impl.1} parent=1 // pred_fallthru
      _
    // Predicated region
    $region10: #{_forward_impl.1} parent=1 // pred_check
      _
    $region11: #{_forward_impl.1} parent=1 // pred_check_branch
      %24 = sbr.rel (0) target = $region13
    $region12: #{_forward_impl.1} parent=1 // pred_region
      %s26 = ssub.s32 8192, 8192
      %27 = vsyncadd [#allocation3], %s26
      %s28 = sshll.u32 [#allocation2], 4
      %s29 = int_to_ptr.vmem [resolvable:$true] %s28
      %34 = dma.hbm_to_vmem [thread:$0]  %s2, 8192, %s29, [#allocation3], 64, 64, 4
    $region13: #{_forward_impl.1} parent=1 // pred_fallthru
      _
    // Predicated region
    $region14: #{_forward_impl.1} parent=1 // pred_check
      _
    $region15: #{_forward_impl.1} parent=1 // pred_check_branch
      %36 = sbr.rel (0) target = $region17
    $region16: #{_forward_impl.1} parent=1 // pred_region
      _
    $region17: #{_forward_impl.1} parent=1 // pred_fallthru
      _
    // Predicated region
    $region18: #{_forward_impl.1} parent=1 // pred_check
      _
    $region19: #{_forward_impl.1} parent=1 // pred_check_branch
      %38 = sbr.rel (0) target = $region21
    $region20: #{_forward_impl.1} parent=1 // pred_region
      _
    $region21: #{_forward_impl.1} parent=1 // pred_fallthru
      _
    // Predicated region
    $region22: #{_forward_impl.1} parent=1 // pred_check
      _
    $region23: #{_forward_impl.1} parent=1 // pred_check_branch
      %40 = sbr.rel (0) target = $region25
    $region24: #{_forward_impl.1} parent=1 // pred_region
      _
    $region25: #{_forward_impl.1} parent=1 // pred_fallthru
      _
    // Predicated region
    $region26: #{_forward_impl.1} parent=1 // pred_check
      _
    $region27: #{_forward_impl.1} parent=1 // pred_check_branch
      %42 = sbr.rel (0) target = $region29
    $region28: #{_forward_impl.1} parent=1 // pred_region
      _
    $region29: #{_forward_impl.1} parent=1 // pred_fallthru
      _
    // Predicated region
    $region30: #{_forward_impl.1} parent=1 // pred_check
      _
    $region31: #{_forward_impl.1} parent=1 // pred_check_branch
      %44 = sbr.rel (0) target = $region33
    $region32: #{_forward_impl.1} parent=1 // pred_region
      _
    $region33: #{_forward_impl.1} parent=1 // pred_fallthru
      _
    // Predicated region
    $region34: #{_forward_impl.1} parent=1 // pred_check
      _
    $region35: #{_forward_impl.1} parent=1 // pred_check_branch
      %46 = sbr.rel (0) target = $region37
    $region36: #{_forward_impl.1} parent=1 // pred_region
      _
    $region37: #{_forward_impl.1} parent=1 // pred_fallthru
      _
    // Predicated region
    $region38: #{_forward_impl.1} parent=1 // pred_check
      _
    $region39: #{_forward_impl.1} parent=1 // pred_check_branch
      %48 = sbr.rel (0) target = $region41
    $region40: #{_forward_impl.1} parent=1 // pred_region
      _
    $region41: #{_forward_impl.1} parent=1 // pred_fallthru
      _
    // Predicated region
    $region42: #{_forward_impl.1} parent=1 // pred_check
      _
    $region43: #{_forward_impl.1} parent=1 // pred_check_branch
      %50 = sbr.rel (0) target = $region45
    $region44: #{_forward_impl.1} parent=1 // pred_region
      %51 = dma.done [#allocation3], 8192
    $region45: #{_forward_impl.1} parent=1 // pred_fallthru
      _
    %v53 = vld [vmem:[%s0] sm:$0xff]
    %v54 = vld [vmem:[#allocation2] sm:$0xf]
    %v55 = vld [vmem:[#allocation2 + $0x4] sm:$0xf]
    %v56 = vld [vmem:[#allocation2 + $0x8] sm:$0xf]
    %v57 = vld [vmem:[#allocation2 + $0xc] sm:$0xf]
    %v58 = vld [vmem:[#allocation2 + $0x10] sm:$0xf]
    %v59 = vld [vmem:[#allocation2 + $0x14] sm:$0xf]
    %v60 = vld [vmem:[#allocation2 + $0x18] sm:$0xf]
    %v61 = vld [vmem:[#allocation2 + $0x1c] sm:$0xf]
    %v62 = vld [vmem:[#allocation2 + $0x20] sm:$0xf]
    %v63 = vld [vmem:[#allocation2 + $0x24] sm:$0xf]
    %v64 = vld [vmem:[#allocation2 + $0x28] sm:$0xf]
    %v65 = vld [vmem:[#allocation2 + $0x2c] sm:$0xf]
    %v66 = vld [vmem:[#allocation2 + $0x30] sm:$0xf]
    %v67 = vld [vmem:[#allocation2 + $0x34] sm:$0xf]
    %v68 = vld [vmem:[#allocation2 + $0x38] sm:$0xf]
    %v69 = vld [vmem:[#allocation2 + $0x3c] sm:$0xf]
    %v70 = vld [vmem:[#allocation2 + $0x40] sm:$0xf]
    %v71 = vld [vmem:[#allocation2 + $0x44] sm:$0xf]
    %v72 = vld [vmem:[#allocation2 + $0x48] sm:$0xf]
    %v73 = vld [vmem:[#allocation2 + $0x4c] sm:$0xf]
    %v74 = vld [vmem:[#allocation2 + $0x50] sm:$0xf]
    %v75 = vld [vmem:[#allocation2 + $0x54] sm:$0xf]
    %v76 = vld [vmem:[#allocation2 + $0x58] sm:$0xf]
    %v77 = vld [vmem:[#allocation2 + $0x5c] sm:$0xf]
    %v78 = vld [vmem:[#allocation2 + $0x60] sm:$0xf]
    %v79 = vld [vmem:[#allocation2 + $0x64] sm:$0xf]
    %v80 = vld [vmem:[#allocation2 + $0x68] sm:$0xf]
    %v81 = vld [vmem:[#allocation2 + $0x6c] sm:$0xf]
    %v82 = vld [vmem:[#allocation2 + $0x70] sm:$0xf]
    %v83 = vld [vmem:[#allocation2 + $0x74] sm:$0xf]
    %v84 = vld [vmem:[#allocation2 + $0x78] sm:$0xf]
    %v85 = vld [vmem:[#allocation2 + $0x7c] sm:$0xf]
    %v86 = vld [vmem:[#allocation2 + $0x80] sm:$0xf]
    %v87 = vld [vmem:[#allocation2 + $0x84] sm:$0xf]
    %v88 = vld [vmem:[#allocation2 + $0x88] sm:$0xf]
    %v89 = vld [vmem:[#allocation2 + $0x8c] sm:$0xf]
    %v90 = vld [vmem:[#allocation2 + $0x90] sm:$0xf]
    %v91 = vld [vmem:[#allocation2 + $0x94] sm:$0xf]
    %v92 = vld [vmem:[#allocation2 + $0x98] sm:$0xf]
    %v93 = vld [vmem:[#allocation2 + $0x9c] sm:$0xf]
    %v94 = vld [vmem:[#allocation2 + $0xa0] sm:$0xf]
    %v95 = vld [vmem:[#allocation2 + $0xa4] sm:$0xf]
    %v96 = vld [vmem:[#allocation2 + $0xa8] sm:$0xf]
    %v97 = vld [vmem:[#allocation2 + $0xac] sm:$0xf]
    %v98 = vld [vmem:[#allocation2 + $0xb0] sm:$0xf]
    %v99 = vld [vmem:[#allocation2 + $0xb4] sm:$0xf]
    %v100 = vld [vmem:[#allocation2 + $0xb8] sm:$0xf]
    %v101 = vld [vmem:[#allocation2 + $0xbc] sm:$0xf]
    %v102 = vld [vmem:[#allocation2 + $0xc0] sm:$0xf]
    %v103 = vld [vmem:[#allocation2 + $0xc4] sm:$0xf]
    %v104 = vld [vmem:[#allocation2 + $0xc8] sm:$0xf]
    %v105 = vld [vmem:[#allocation2 + $0xcc] sm:$0xf]
    %v106 = vld [vmem:[#allocation2 + $0xd0] sm:$0xf]
    %v107 = vld [vmem:[#allocation2 + $0xd4] sm:$0xf]
    %v108 = vld [vmem:[#allocation2 + $0xd8] sm:$0xf]
    %v109 = vld [vmem:[#allocation2 + $0xdc] sm:$0xf]
    %v110 = vld [vmem:[#allocation2 + $0xe0] sm:$0xf]
    %v111 = vld [vmem:[#allocation2 + $0xe4] sm:$0xf]
    %v112 = vld [vmem:[#allocation2 + $0xe8] sm:$0xf]
    %v113 = vld [vmem:[#allocation2 + $0xec] sm:$0xf]
    %v114 = vld [vmem:[#allocation2 + $0xf0] sm:$0xf]
    %v115 = vld [vmem:[#allocation2 + $0xf4] sm:$0xf]
    %v116 = vld [vmem:[#allocation2 + $0xf8] sm:$0xf]
    %v117 = vld [vmem:[#allocation2 + $0xfc] sm:$0xf]
    %v118 = vld [vmem:[#allocation2 + $0x100] sm:$0xf]
    %v119 = vld [vmem:[#allocation2 + $0x104] sm:$0xf]
    %v120 = vld [vmem:[#allocation2 + $0x108] sm:$0xf]
    %v121 = vld [vmem:[#allocation2 + $0x10c] sm:$0xf]
    %v122 = vld [vmem:[#allocation2 + $0x110] sm:$0xf]
    %v123 = vld [vmem:[#allocation2 + $0x114] sm:$0xf]
    %v124 = vld [vmem:[#allocation2 + $0x118] sm:$0xf]
    %v125 = vld [vmem:[#allocation2 + $0x11c] sm:$0xf]
    %v126 = vld [vmem:[#allocation2 + $0x120] sm:$0xf]
    %v127 = vld [vmem:[#allocation2 + $0x124] sm:$0xf]
    %v128 = vld [vmem:[#allocation2 + $0x128] sm:$0xf]
    %v129 = vld [vmem:[#allocation2 + $0x12c] sm:$0xf]
    %v130 = vld [vmem:[#allocation2 + $0x130] sm:$0xf]
    %v131 = vld [vmem:[#allocation2 + $0x134] sm:$0xf]
    %v132 = vld [vmem:[#allocation2 + $0x138] sm:$0xf]
    %v133 = vld [vmem:[#allocation2 + $0x13c] sm:$0xf]
    %v134 = vld [vmem:[#allocation2 + $0x140] sm:$0xf]
    %v135 = vld [vmem:[#allocation2 + $0x144] sm:$0xf]
    %v136 = vld [vmem:[#allocation2 + $0x148] sm:$0xf]
    %v137 = vld [vmem:[#allocation2 + $0x14c] sm:$0xf]
    %v138 = vld [vmem:[#allocation2 + $0x150] sm:$0xf]
    %v139 = vld [vmem:[#allocation2 + $0x154] sm:$0xf]
    %v140 = vld [vmem:[#allocation2 + $0x158] sm:$0xf]
    %v141 = vld [vmem:[#allocation2 + $0x15c] sm:$0xf]
    %v142 = vld [vmem:[#allocation2 + $0x160] sm:$0xf]
    %v143 = vld [vmem:[#allocation2 + $0x164] sm:$0xf]
    %v144 = vld [vmem:[#allocation2 + $0x168] sm:$0xf]
    %v145 = vld [vmem:[#allocation2 + $0x16c] sm:$0xf]
    %v146 = vld [vmem:[#allocation2 + $0x170] sm:$0xf]
    %v147 = vld [vmem:[#allocation2 + $0x174] sm:$0xf]
    %v148 = vld [vmem:[#allocation2 + $0x178] sm:$0xf]
    %v149 = vld [vmem:[#allocation2 + $0x17c] sm:$0xf]
    %v150 = vld [vmem:[#allocation2 + $0x180] sm:$0xf]
    %v151 = vld [vmem:[#allocation2 + $0x184] sm:$0xf]
    %v152 = vld [vmem:[#allocation2 + $0x188] sm:$0xf]
    %v153 = vld [vmem:[#allocation2 + $0x18c] sm:$0xf]
    %v154 = vld [vmem:[#allocation2 + $0x190] sm:$0xf]
    %v155 = vld [vmem:[#allocation2 + $0x194] sm:$0xf]
    %v156 = vld [vmem:[#allocation2 + $0x198] sm:$0xf]
    %v157 = vld [vmem:[#allocation2 + $0x19c] sm:$0xf]
    %v158 = vld [vmem:[#allocation2 + $0x1a0] sm:$0xf]
    %v159 = vld [vmem:[#allocation2 + $0x1a4] sm:$0xf]
    %v160 = vld [vmem:[#allocation2 + $0x1a8] sm:$0xf]
    %v161 = vld [vmem:[#allocation2 + $0x1ac] sm:$0xf]
    %v162 = vld [vmem:[#allocation2 + $0x1b0] sm:$0xf]
    %v163 = vld [vmem:[#allocation2 + $0x1b4] sm:$0xf]
    %v164 = vld [vmem:[#allocation2 + $0x1b8] sm:$0xf]
    %v165 = vld [vmem:[#allocation2 + $0x1bc] sm:$0xf]
    %v166 = vld [vmem:[#allocation2 + $0x1c0] sm:$0xf]
    %v167 = vld [vmem:[#allocation2 + $0x1c4] sm:$0xf]
    %v168 = vld [vmem:[#allocation2 + $0x1c8] sm:$0xf]
    %v169 = vld [vmem:[#allocation2 + $0x1cc] sm:$0xf]
    %v170 = vld [vmem:[#allocation2 + $0x1d0] sm:$0xf]
    %v171 = vld [vmem:[#allocation2 + $0x1d4] sm:$0xf]
    %v172 = vld [vmem:[#allocation2 + $0x1d8] sm:$0xf]
    %v173 = vld [vmem:[#allocation2 + $0x1dc] sm:$0xf]
    %v174 = vld [vmem:[#allocation2 + $0x1e0] sm:$0xf]
    %v175 = vld [vmem:[#allocation2 + $0x1e4] sm:$0xf]
    %v176 = vld [vmem:[#allocation2 + $0x1e8] sm:$0xf]
    %v177 = vld [vmem:[#allocation2 + $0x1ec] sm:$0xf]
    %v178 = vld [vmem:[#allocation2 + $0x1f0] sm:$0xf]
    %v179 = vld [vmem:[#allocation2 + $0x1f4] sm:$0xf]
    %v180 = vld [vmem:[#allocation2 + $0x1f8] sm:$0xf]
    %v181 = vld [vmem:[#allocation2 + $0x1fc] sm:$0xf]
    %v182 = vld [vmem:[%s3] sm:$0x1]
    %v184 = vlaneseq
    %v185 = vshrl.u32 %v184, 7
    %v186 = vsub.s32 0, %v185
    %v187 = vrot.slane %v182, %v186
    %v190 = vcombine.high %v53, %v53
    %v192 = vunpack.c.l.s4 1966171168
    %v193 = vunpack.c.0.s8 %v192
    %v194 = vlaneseq
    %v195 = vshrl.u32 %v194, 7
    %v196 = vsub.s32 %v193, %v195
    %v197 = vrot.slane %v53, %v196
    %v199 = vunpack.c.l.s4 1966171168
    %v200 = vunpack.c.0.s8 %v199
    %v201 = vlaneseq
    %v202 = vshrl.u32 %v201, 7
    %v203 = vsub.s32 %v200, %v202
    %v204 = vrot.slane %v190, %v203
    %v205 = vcombine.high %v197, %v197
    %v206 = vcombine.high %v204, %v204
    %v208 = vunpack.c.l.s4 1966171168
    %v209 = vunpack.c.0.s8 %v208
    %v210 = vlaneseq
    %v211 = vshrl.u32 %v210, 7
    %v212 = vsub.s32 %v209, %v211
    %v213 = vrot.slane %v197, %v212
    %v215 = vunpack.c.l.s4 1966171168
    %v216 = vunpack.c.0.s8 %v215
    %v217 = vlaneseq
    %v218 = vshrl.u32 %v217, 7
    %v219 = vsub.s32 %v216, %v218
    %v220 = vrot.slane %v204, %v219
    %v222 = vunpack.c.l.s4 1966171168
    %v223 = vunpack.c.0.s8 %v222
    %v224 = vlaneseq
    %v225 = vshrl.u32 %v224, 7
    %v226 = vsub.s32 %v223, %v225
    %v227 = vrot.slane %v205, %v226
    %v229 = vunpack.c.l.s4 1966171168
    %v230 = vunpack.c.0.s8 %v229
    %v231 = vlaneseq
    %v232 = vshrl.u32 %v231, 7
    %v233 = vsub.s32 %v230, %v232
    %v234 = vrot.slane %v206, %v233
    %v235 = vcombine.high %v213, %v213
    %v236 = vcombine.high %v220, %v220
    %v237 = vcombine.high %v227, %v227
    %v238 = vcombine.high %v234, %v234
    %v375 = vunpack.c.l.b16 %v54
    %v376 = vunpack.c.l.b16 %v55
    %v377 = vunpack.c.l.b16 %v56
    %v378 = vunpack.c.l.b16 %v57
    %v379 = vunpack.c.l.b16 %v58
    %v380 = vunpack.c.l.b16 %v59
    %v381 = vunpack.c.l.b16 %v60
    %v382 = vunpack.c.l.b16 %v61
    %v383 = vunpack.c.l.b16 %v62
    %v384 = vunpack.c.l.b16 %v63
    %v385 = vunpack.c.l.b16 %v64
    %v386 = vunpack.c.l.b16 %v65
    %v387 = vunpack.c.l.b16 %v66
    %v388 = vunpack.c.l.b16 %v67
    %v389 = vunpack.c.l.b16 %v68
    %v390 = vunpack.c.l.b16 %v69
    %v391 = vunpack.c.l.b16 %v70
    %v392 = vunpack.c.l.b16 %v71
    %v393 = vunpack.c.l.b16 %v72
    %v394 = vunpack.c.l.b16 %v73
    %v395 = vunpack.c.l.b16 %v74
    %v396 = vunpack.c.l.b16 %v75
    %v397 = vunpack.c.l.b16 %v76
    %v398 = vunpack.c.l.b16 %v77
    %v399 = vunpack.c.l.b16 %v78
    %v400 = vunpack.c.l.b16 %v79
    %v401 = vunpack.c.l.b16 %v80
    %v402 = vunpack.c.l.b16 %v81
    %v403 = vunpack.c.l.b16 %v82
    %v404 = vunpack.c.l.b16 %v83
    %v405 = vunpack.c.l.b16 %v84
    %v406 = vunpack.c.l.b16 %v85
    %v407 = vunpack.c.l.b16 %v86
    %v408 = vunpack.c.l.b16 %v87
    %v409 = vunpack.c.l.b16 %v88
    %v410 = vunpack.c.l.b16 %v89
    %v411 = vunpack.c.l.b16 %v90
    %v412 = vunpack.c.l.b16 %v91
    %v413 = vunpack.c.l.b16 %v92
    %v414 = vunpack.c.l.b16 %v93
    %v415 = vunpack.c.l.b16 %v94
    %v416 = vunpack.c.l.b16 %v95
    %v417 = vunpack.c.l.b16 %v96
    %v418 = vunpack.c.l.b16 %v97
    %v419 = vunpack.c.l.b16 %v98
    %v420 = vunpack.c.l.b16 %v99
    %v421 = vunpack.c.l.b16 %v100
    %v422 = vunpack.c.l.b16 %v101
    %v423 = vunpack.c.l.b16 %v102
    %v424 = vunpack.c.l.b16 %v103
    %v425 = vunpack.c.l.b16 %v104
    %v426 = vunpack.c.l.b16 %v105
    %v427 = vunpack.c.l.b16 %v106
    %v428 = vunpack.c.l.b16 %v107
    %v429 = vunpack.c.l.b16 %v108
    %v430 = vunpack.c.l.b16 %v109
    %v431 = vunpack.c.l.b16 %v110
    %v432 = vunpack.c.l.b16 %v111
    %v433 = vunpack.c.l.b16 %v112
    %v434 = vunpack.c.l.b16 %v113
    %v435 = vunpack.c.l.b16 %v114
    %v436 = vunpack.c.l.b16 %v115
    %v437 = vunpack.c.l.b16 %v116
    %v438 = vunpack.c.l.b16 %v117
    %v439 = vunpack.c.l.b16 %v118
    %v440 = vunpack.c.l.b16 %v119
    %v441 = vunpack.c.l.b16 %v120
    %v442 = vunpack.c.l.b16 %v121
    %v443 = vunpack.c.l.b16 %v122
    %v444 = vunpack.c.l.b16 %v123
    %v445 = vunpack.c.l.b16 %v124
    %v446 = vunpack.c.l.b16 %v125
    %v447 = vunpack.c.l.b16 %v126
    %v448 = vunpack.c.l.b16 %v127
    %v449 = vunpack.c.l.b16 %v128
    %v450 = vunpack.c.l.b16 %v129
    %v451 = vunpack.c.l.b16 %v130
    %v452 = vunpack.c.l.b16 %v131
    %v453 = vunpack.c.l.b16 %v132
    %v454 = vunpack.c.l.b16 %v133
    %v455 = vunpack.c.l.b16 %v134
    %v456 = vunpack.c.l.b16 %v135
    %v457 = vunpack.c.l.b16 %v136
    %v458 = vunpack.c.l.b16 %v137
    %v459 = vunpack.c.l.b16 %v138
    %v460 = vunpack.c.l.b16 %v139
    %v461 = vunpack.c.l.b16 %v140
    %v462 = vunpack.c.l.b16 %v141
    %v463 = vunpack.c.l.b16 %v142
    %v464 = vunpack.c.l.b16 %v143
    %v465 = vunpack.c.l.b16 %v144
    %v466 = vunpack.c.l.b16 %v145
    %v467 = vunpack.c.l.b16 %v146
    %v468 = vunpack.c.l.b16 %v147
    %v469 = vunpack.c.l.b16 %v148
    %v470 = vunpack.c.l.b16 %v149
    %v471 = vunpack.c.l.b16 %v150
    %v472 = vunpack.c.l.b16 %v151
    %v473 = vunpack.c.l.b16 %v152
    %v474 = vunpack.c.l.b16 %v153
    %v475 = vunpack.c.l.b16 %v154
    %v476 = vunpack.c.l.b16 %v155
    %v477 = vunpack.c.l.b16 %v156
    %v478 = vunpack.c.l.b16 %v157
    %v479 = vunpack.c.l.b16 %v158
    %v480 = vunpack.c.l.b16 %v159
    %v481 = vunpack.c.l.b16 %v160
    %v482 = vunpack.c.l.b16 %v161
    %v483 = vunpack.c.l.b16 %v162
    %v484 = vunpack.c.l.b16 %v163
    %v485 = vunpack.c.l.b16 %v164
    %v486 = vunpack.c.l.b16 %v165
    %v487 = vunpack.c.l.b16 %v166
    %v488 = vunpack.c.l.b16 %v167
    %v489 = vunpack.c.l.b16 %v168
    %v490 = vunpack.c.l.b16 %v169
    %v491 = vunpack.c.l.b16 %v170
    %v492 = vunpack.c.l.b16 %v171
    %v493 = vunpack.c.l.b16 %v172
    %v494 = vunpack.c.l.b16 %v173
    %v495 = vunpack.c.l.b16 %v174
    %v496 = vunpack.c.l.b16 %v175
    %v497 = vunpack.c.l.b16 %v176
    %v498 = vunpack.c.l.b16 %v177
    %v499 = vunpack.c.l.b16 %v178
    %v500 = vunpack.c.l.b16 %v179
    %v501 = vunpack.c.l.b16 %v180
    %v502 = vunpack.c.l.b16 %v181
    %v503 = vpack.c.b16 %v376, %v375
    %v504 = vpack.c.b16 %v378, %v377
    %v505 = vpack.c.b16 %v380, %v379
    %v506 = vpack.c.b16 %v382, %v381
    %v507 = vpack.c.b16 %v384, %v383
    %v508 = vpack.c.b16 %v386, %v385
    %v509 = vpack.c.b16 %v388, %v387
    %v510 = vpack.c.b16 %v390, %v389
    %v511 = vpack.c.b16 %v392, %v391
    %v512 = vpack.c.b16 %v394, %v393
    %v513 = vpack.c.b16 %v396, %v395
    %v514 = vpack.c.b16 %v398, %v397
    %v515 = vpack.c.b16 %v400, %v399
    %v516 = vpack.c.b16 %v402, %v401
    %v517 = vpack.c.b16 %v404, %v403
    %v518 = vpack.c.b16 %v406, %v405
    %v519 = vpack.c.b16 %v408, %v407
    %v520 = vpack.c.b16 %v410, %v409
    %v521 = vpack.c.b16 %v412, %v411
    %v522 = vpack.c.b16 %v414, %v413
    %v523 = vpack.c.b16 %v416, %v415
    %v524 = vpack.c.b16 %v418, %v417
    %v525 = vpack.c.b16 %v420, %v419
    %v526 = vpack.c.b16 %v422, %v421
    %v527 = vpack.c.b16 %v424, %v423
    %v528 = vpack.c.b16 %v426, %v425
    %v529 = vpack.c.b16 %v428, %v427
    %v530 = vpack.c.b16 %v430, %v429
    %v531 = vpack.c.b16 %v432, %v431
    %v532 = vpack.c.b16 %v434, %v433
    %v533 = vpack.c.b16 %v436, %v435
    %v534 = vpack.c.b16 %v438, %v437
    %v535 = vpack.c.b16 %v440, %v439
    %v536 = vpack.c.b16 %v442, %v441
    %v537 = vpack.c.b16 %v444, %v443
    %v538 = vpack.c.b16 %v446, %v445
    %v539 = vpack.c.b16 %v448, %v447
    %v540 = vpack.c.b16 %v450, %v449
    %v541 = vpack.c.b16 %v452, %v451
    %v542 = vpack.c.b16 %v454, %v453
    %v543 = vpack.c.b16 %v456, %v455
    %v544 = vpack.c.b16 %v458, %v457
    %v545 = vpack.c.b16 %v460, %v459
    %v546 = vpack.c.b16 %v462, %v461
    %v547 = vpack.c.b16 %v464, %v463
    %v548 = vpack.c.b16 %v466, %v465
    %v549 = vpack.c.b16 %v468, %v467
    %v550 = vpack.c.b16 %v470, %v469
    %v551 = vpack.c.b16 %v472, %v471
    %v552 = vpack.c.b16 %v474, %v473
    %v553 = vpack.c.b16 %v476, %v475
    %v554 = vpack.c.b16 %v478, %v477
    %v555 = vpack.c.b16 %v480, %v479
    %v556 = vpack.c.b16 %v482, %v481
    %v557 = vpack.c.b16 %v484, %v483
    %v558 = vpack.c.b16 %v486, %v485
    %v559 = vpack.c.b16 %v488, %v487
    %v560 = vpack.c.b16 %v490, %v489
    %v561 = vpack.c.b16 %v492, %v491
    %v562 = vpack.c.b16 %v494, %v493
    %v563 = vpack.c.b16 %v496, %v495
    %v564 = vpack.c.b16 %v498, %v497
    %v565 = vpack.c.b16 %v500, %v499
    %v566 = vpack.c.b16 %v502, %v501
    %631 = vmatprep.subr.bf16.mxu0 0
    %632 = vmatpush1.bf16.msra.mxu0 %v503
    %633 = vmatprep.subr.bf16.mxu0 0
    %634 = vmatpush1.bf16.msra.mxu0 %v504
    %635 = vmatprep.subr.bf16.mxu0 0
    %636 = vmatpush1.bf16.msra.mxu0 %v505
    %637 = vmatprep.subr.bf16.mxu0 0
    %638 = vmatpush1.bf16.msra.mxu0 %v506
    %639 = vmatprep.subr.bf16.mxu0 0
    %640 = vmatpush1.bf16.msra.mxu0 %v507
    %641 = vmatprep.subr.bf16.mxu0 0
    %642 = vmatpush1.bf16.msra.mxu0 %v508
    %643 = vmatprep.subr.bf16.mxu0 0
    %644 = vmatpush1.bf16.msra.mxu0 %v509
    %645 = vmatprep.subr.bf16.mxu0 0
    %646 = vmatpush1.bf16.msra.mxu0 %v510
    %647 = vmatprep.subr.bf16.mxu0 0
    %648 = vmatpush1.bf16.msra.mxu0 %v511
    %649 = vmatprep.subr.bf16.mxu0 0
    %650 = vmatpush1.bf16.msra.mxu0 %v512
    %651 = vmatprep.subr.bf16.mxu0 0
    %652 = vmatpush1.bf16.msra.mxu0 %v513
    %653 = vmatprep.subr.bf16.mxu0 0
    %654 = vmatpush1.bf16.msra.mxu0 %v514
    %655 = vmatprep.subr.bf16.mxu0 0
    %656 = vmatpush1.bf16.msra.mxu0 %v515
    %657 = vmatprep.subr.bf16.mxu0 0
    %658 = vmatpush1.bf16.msra.mxu0 %v516
    %659 = vmatprep.subr.bf16.mxu0 0
    %660 = vmatpush1.bf16.msra.mxu0 %v517
    %661 = vmatprep.subr.bf16.mxu0 0
    %662 = vmatpush1.bf16.msra.mxu0 %v518
    %663 = vmatprep.mubr.bf16.mxu0 %v227
    %664 = vmatmul.mubr.bf16.gmra.mrb[0].mxu0 %v213
    %v665 = vpop.f32.mrb[0].mxu0
    %v666 = vadd.f32 %v187, %v665
    %v667 = vpop.f32.mrb[0].mxu0
    %v668 = vpop.f32.mrb[0].mxu0
    %v669 = vpop.f32.mrb[0].mxu0
    %670 = vdwg.mxu0
    %671 = vmatprep.subr.bf16.mxu0 0
    %672 = vmatpush1.bf16.msra.mxu0 %v519
    %673 = vmatprep.subr.bf16.mxu0 0
    %674 = vmatpush1.bf16.msra.mxu0 %v520
    %675 = vmatprep.subr.bf16.mxu0 0
    %676 = vmatpush1.bf16.msra.mxu0 %v521
    %677 = vmatprep.subr.bf16.mxu0 0
    %678 = vmatpush1.bf16.msra.mxu0 %v522
    %679 = vmatprep.subr.bf16.mxu0 0
    %680 = vmatpush1.bf16.msra.mxu0 %v523
    %681 = vmatprep.subr.bf16.mxu0 0
    %682 = vmatpush1.bf16.msra.mxu0 %v524
    %683 = vmatprep.subr.bf16.mxu0 0
    %684 = vmatpush1.bf16.msra.mxu0 %v525
    %685 = vmatprep.subr.bf16.mxu0 0
    %686 = vmatpush1.bf16.msra.mxu0 %v526
    %687 = vmatprep.subr.bf16.mxu0 0
    %688 = vmatpush1.bf16.msra.mxu0 %v527
    %689 = vmatprep.subr.bf16.mxu0 0
    %690 = vmatpush1.bf16.msra.mxu0 %v528
    %691 = vmatprep.subr.bf16.mxu0 0
    %692 = vmatpush1.bf16.msra.mxu0 %v529
    %693 = vmatprep.subr.bf16.mxu0 0
    %694 = vmatpush1.bf16.msra.mxu0 %v530
    %695 = vmatprep.subr.bf16.mxu0 0
    %696 = vmatpush1.bf16.msra.mxu0 %v531
    %697 = vmatprep.subr.bf16.mxu0 0
    %698 = vmatpush1.bf16.msra.mxu0 %v532
    %699 = vmatprep.subr.bf16.mxu0 0
    %700 = vmatpush1.bf16.msra.mxu0 %v533
    %701 = vmatprep.subr.bf16.mxu0 0
    %702 = vmatpush1.bf16.msra.mxu0 %v534
    %703 = vmatprep.mubr.bf16.mxu0 %v237
    %704 = vmatmul.mubr.bf16.gmra.mrb[0].mxu0 %v235
    %v705 = vpop.f32.mrb[0].mxu0
    %v706 = vadd.f32 %v666, %v705
    %v707 = vpop.f32.mrb[0].mxu0
    %v708 = vpop.f32.mrb[0].mxu0
    %v709 = vpop.f32.mrb[0].mxu0
    %710 = vdwg.mxu0
    %711 = vmatprep.subr.bf16.mxu0 0
    %712 = vmatpush1.bf16.msra.mxu0 %v535
    %713 = vmatprep.subr.bf16.mxu0 0
    %714 = vmatpush1.bf16.msra.mxu0 %v536
    %715 = vmatprep.subr.bf16.mxu0 0
    %716 = vmatpush1.bf16.msra.mxu0 %v537
    %717 = vmatprep.subr.bf16.mxu0 0
    %718 = vmatpush1.bf16.msra.mxu0 %v538
    %719 = vmatprep.subr.bf16.mxu0 0
    %720 = vmatpush1.bf16.msra.mxu0 %v539
    %721 = vmatprep.subr.bf16.mxu0 0
    %722 = vmatpush1.bf16.msra.mxu0 %v540
    %723 = vmatprep.subr.bf16.mxu0 0
    %724 = vmatpush1.bf16.msra.mxu0 %v541
    %725 = vmatprep.subr.bf16.mxu0 0
    %726 = vmatpush1.bf16.msra.mxu0 %v542
    %727 = vmatprep.subr.bf16.mxu0 0
    %728 = vmatpush1.bf16.msra.mxu0 %v543
    %729 = vmatprep.subr.bf16.mxu0 0
    %730 = vmatpush1.bf16.msra.mxu0 %v544
    %731 = vmatprep.subr.bf16.mxu0 0
    %732 = vmatpush1.bf16.msra.mxu0 %v545
    %733 = vmatprep.subr.bf16.mxu0 0
    %734 = vmatpush1.bf16.msra.mxu0 %v546
    %735 = vmatprep.subr.bf16.mxu0 0
    %736 = vmatpush1.bf16.msra.mxu0 %v547
    %737 = vmatprep.subr.bf16.mxu0 0
    %738 = vmatpush1.bf16.msra.mxu0 %v548
    %739 = vmatprep.subr.bf16.mxu0 0
    %740 = vmatpush1.bf16.msra.mxu0 %v549
    %741 = vmatprep.subr.bf16.mxu0 0
    %742 = vmatpush1.bf16.msra.mxu0 %v550
    %743 = vmatprep.mubr.bf16.mxu0 %v234
    %744 = vmatmul.mubr.bf16.gmra.mrb[0].mxu0 %v220
    %v745 = vpop.f32.mrb[0].mxu0
    %v746 = vadd.f32 %v706, %v745
    %v747 = vpop.f32.mrb[0].mxu0
    %v748 = vpop.f32.mrb[0].mxu0
    %v749 = vpop.f32.mrb[0].mxu0
    %750 = vdwg.mxu0
    %751 = vmatprep.subr.bf16.mxu0 0
    %752 = vmatpush1.bf16.msra.mxu0 %v551
    %753 = vmatprep.subr.bf16.mxu0 0
    %754 = vmatpush1.bf16.msra.mxu0 %v552
    %755 = vmatprep.subr.bf16.mxu0 0
    %756 = vmatpush1.bf16.msra.mxu0 %v553
    %757 = vmatprep.subr.bf16.mxu0 0
    %758 = vmatpush1.bf16.msra.mxu0 %v554
    %759 = vmatprep.subr.bf16.mxu0 0
    %760 = vmatpush1.bf16.msra.mxu0 %v555
    %761 = vmatprep.subr.bf16.mxu0 0
    %762 = vmatpush1.bf16.msra.mxu0 %v556
    %763 = vmatprep.subr.bf16.mxu0 0
    %764 = vmatpush1.bf16.msra.mxu0 %v557
    %765 = vmatprep.subr.bf16.mxu0 0
    %766 = vmatpush1.bf16.msra.mxu0 %v558
    %767 = vmatprep.subr.bf16.mxu0 0
    %768 = vmatpush1.bf16.msra.mxu0 %v559
    %769 = vmatprep.subr.bf16.mxu0 0
    %770 = vmatpush1.bf16.msra.mxu0 %v560
    %771 = vmatprep.subr.bf16.mxu0 0
    %772 = vmatpush1.bf16.msra.mxu0 %v561
    %773 = vmatprep.subr.bf16.mxu0 0
    %774 = vmatpush1.bf16.msra.mxu0 %v562
    %775 = vmatprep.subr.bf16.mxu0 0
    %776 = vmatpush1.bf16.msra.mxu0 %v563
    %777 = vmatprep.subr.bf16.mxu0 0
    %778 = vmatpush1.bf16.msra.mxu0 %v564
    %779 = vmatprep.subr.bf16.mxu0 0
    %780 = vmatpush1.bf16.msra.mxu0 %v565
    %781 = vmatprep.subr.bf16.mxu0 0
    %782 = vmatpush1.bf16.msra.mxu0 %v566
    %783 = vmatprep.mubr.bf16.mxu0 %v238
    %784 = vmatmul.mubr.bf16.gmra.mrb[0].mxu0 %v236
    %v785 = vpop.f32.mrb[0].mxu0
    %v786 = vadd.f32 %v746, %v785
    %v787 = vpop.f32.mrb[0].mxu0
    %v788 = vpop.f32.mrb[0].mxu0
    %v789 = vpop.f32.mrb[0].mxu0
    %790 = vdwg.mxu0
    %v791 = vpack.c.bf16 %v786, %v786
    %v792 = vld [vmem:[%s4] sm:$0xf]
    %v793 = vld [vmem:[%s4 + $0x4] sm:$0xf]
    %v794 = vld [vmem:[%s4 + $0x8] sm:$0xf]
    %v795 = vld [vmem:[%s4 + $0xc] sm:$0xf]
    %v796 = vld [vmem:[%s4 + $0x10] sm:$0xf]
    %v797 = vld [vmem:[%s4 + $0x14] sm:$0xf]
    %v798 = vld [vmem:[%s4 + $0x18] sm:$0xf]
    %v799 = vld [vmem:[%s4 + $0x1c] sm:$0xf]
    %v800 = vld [vmem:[%s4 + $0x20] sm:$0xf]
    %v801 = vld [vmem:[%s4 + $0x24] sm:$0xf]
    %v802 = vld [vmem:[%s4 + $0x28] sm:$0xf]
    %v803 = vld [vmem:[%s4 + $0x2c] sm:$0xf]
    %v804 = vld [vmem:[%s4 + $0x30] sm:$0xf]
    %v805 = vld [vmem:[%s4 + $0x34] sm:$0xf]
    %v806 = vld [vmem:[%s4 + $0x38] sm:$0xf]
    %v807 = vld [vmem:[%s4 + $0x3c] sm:$0xf]
    %v808 = vld [vmem:[%s5] sm:$0x1]
    %v810 = vlaneseq
    %v811 = vshrl.u32 %v810, 7
    %v812 = vsub.s32 0, %v811
    %v813 = vrot.slane %v808, %v812
    %v831 = vunpack.c.l.b16 %v792
    %v832 = vunpack.c.l.b16 %v793
    %v833 = vunpack.c.l.b16 %v794
    %v834 = vunpack.c.l.b16 %v795
    %v835 = vunpack.c.l.b16 %v796
    %v836 = vunpack.c.l.b16 %v797
    %v837 = vunpack.c.l.b16 %v798
    %v838 = vunpack.c.l.b16 %v799
    %v839 = vunpack.c.l.b16 %v800
    %v840 = vunpack.c.l.b16 %v801
    %v841 = vunpack.c.l.b16 %v802
    %v842 = vunpack.c.l.b16 %v803
    %v843 = vunpack.c.l.b16 %v804
    %v844 = vunpack.c.l.b16 %v805
    %v845 = vunpack.c.l.b16 %v806
    %v846 = vunpack.c.l.b16 %v807
    %v847 = vpack.c.b16 %v832, %v831
    %v848 = vpack.c.b16 %v834, %v833
    %v849 = vpack.c.b16 %v836, %v835
    %v850 = vpack.c.b16 %v838, %v837
    %v851 = vpack.c.b16 %v840, %v839
    %v852 = vpack.c.b16 %v842, %v841
    %v853 = vpack.c.b16 %v844, %v843
    %v854 = vpack.c.b16 %v846, %v845
    %863 = vmatprep.subr.bf16.mxu0 0
    %864 = vmatpush1.bf16.msra.mxu0 %v847
    %865 = vmatprep.subr.bf16.mxu0 0
    %866 = vmatpush1.bf16.msra.mxu0 %v848
    %867 = vmatprep.subr.bf16.mxu0 0
    %868 = vmatpush1.bf16.msra.mxu0 %v849
    %869 = vmatprep.subr.bf16.mxu0 0
    %870 = vmatpush1.bf16.msra.mxu0 %v850
    %871 = vmatprep.subr.bf16.mxu0 0
    %872 = vmatpush1.bf16.msra.mxu0 %v851
    %873 = vmatprep.subr.bf16.mxu0 0
    %874 = vmatpush1.bf16.msra.mxu0 %v852
    %875 = vmatprep.subr.bf16.mxu0 0
    %876 = vmatpush1.bf16.msra.mxu0 %v853
    %877 = vmatprep.subr.bf16.mxu0 0
    %878 = vmatpush1.bf16.msra.mxu0 %v854
    %879 = vmatprep.subr.bf16.mxu0 0
    %880 = vmatpush1.bf16.msra.mxu0 0
    %881 = vmatprep.subr.bf16.mxu0 0
    %882 = vmatpush1.bf16.msra.mxu0 0
    %883 = vmatprep.subr.bf16.mxu0 0
    %884 = vmatpush1.bf16.msra.mxu0 0
    %885 = vmatprep.subr.bf16.mxu0 0
    %886 = vmatpush1.bf16.msra.mxu0 0
    %887 = vmatprep.subr.bf16.mxu0 0
    %888 = vmatpush1.bf16.msra.mxu0 0
    %889 = vmatprep.subr.bf16.mxu0 0
    %890 = vmatpush1.bf16.msra.mxu0 0
    %891 = vmatprep.subr.bf16.mxu0 0
    %892 = vmatpush1.bf16.msra.mxu0 0
    %893 = vmatprep.subr.bf16.mxu0 0
    %894 = vmatpush1.bf16.msra.mxu0 0
    %895 = vmatprep.mubr.bf16.mxu0 0
    %896 = vmatmul.mubr.bf16.gmra.mrb[0].mxu0 %v791
    %v897 = vpop.f32.mrb[0].mxu0
    %v898 = vadd.f32 %v813, %v897
    %v899 = vpop.f32.mrb[0].mxu0
    %v900 = vpop.f32.mrb[0].mxu0
    %v901 = vpop.f32.mrb[0].mxu0
    %902 = vdwg.mxu0
    %v903 = vmul.f32 %v898, 0.5
    %v904 = vmul.f32 %v898, 0.044715
    %v905 = vmul.f32 %v904, %v898
    %v906 = vmul.f32 %v905, %v898
    %v907 = vadd.f32 %v898, %v906
    %v908 = vmul.f32 %v907, 0.7978846
    %v909 = vtanh.pop %v908
    %v910 = vadd.f32 %v909, 1.0
    %v911 = vmul.f32 %v903, %v910
    %v912 = vpack.c.bf16 %v911, %v911
    %v913 = vld [vmem:[%s6] sm:$0xf]
    %v914 = vld [vmem:[%s6 + $0x4] sm:$0xf]
    %v915 = vld [vmem:[%s7] sm:$0x1]
    %v917 = vlaneseq
    %v918 = vshrl.u32 %v917, 7
    %v919 = vsub.s32 0, %v918
    %v920 = vrot.slane %v915, %v919
    %v924 = vunpack.c.l.b16 %v913
    %v925 = vunpack.c.l.b16 %v914
    %v926 = vpack.c.b16 %v925, %v924
    %vm928 = vcmask 130048
    %v930 = vsel %vm928, %v912, 0
    %932 = vmatprep.subr.bf16.mxu0 0
    %933 = vmatpush1.bf16.msra.mxu0 %v926
    %934 = vmatprep.subr.bf16.mxu0 0
    %935 = vmatpush1.bf16.msra.mxu0 0
    %936 = vmatprep.subr.bf16.mxu0 0
    %937 = vmatpush1.bf16.msra.mxu0 0
    %938 = vmatprep.subr.bf16.mxu0 0
    %939 = vmatpush1.bf16.msra.mxu0 0
    %940 = vmatprep.subr.bf16.mxu0 0
    %941 = vmatpush1.bf16.msra.mxu0 0
    %942 = vmatprep.subr.bf16.mxu0 0
    %943 = vmatpush1.bf16.msra.mxu0 0
    %944 = vmatprep.subr.bf16.mxu0 0
    %945 = vmatpush1.bf16.msra.mxu0 0
    %946 = vmatprep.subr.bf16.mxu0 0
    %947 = vmatpush1.bf16.msra.mxu0 0
    %948 = vmatprep.subr.bf16.mxu0 0
    %949 = vmatpush1.bf16.msra.mxu0 0
    %950 = vmatprep.subr.bf16.mxu0 0
    %951 = vmatpush1.bf16.msra.mxu0 0
    %952 = vmatprep.subr.bf16.mxu0 0
    %953 = vmatpush1.bf16.msra.mxu0 0
    %954 = vmatprep.subr.bf16.mxu0 0
    %955 = vmatpush1.bf16.msra.mxu0 0
    %956 = vmatprep.subr.bf16.mxu0 0
    %957 = vmatpush1.bf16.msra.mxu0 0
    %958 = vmatprep.subr.bf16.mxu0 0
    %959 = vmatpush1.bf16.msra.mxu0 0
    %960 = vmatprep.subr.bf16.mxu0 0
    %961 = vmatpush1.bf16.msra.mxu0 0
    %962 = vmatprep.subr.bf16.mxu0 0
    %963 = vmatpush1.bf16.msra.mxu0 0
    %964 = vmatprep.mubr.bf16.mxu0 0
    %965 = vmatmul.mubr.bf16.gmra.mrb[0].mxu0 %v930
    %v966 = vpop.f32.mrb[0].mxu0
    %v967 = vadd.f32 %v920, %v966
    %v968 = vpop.f32.mrb[0].mxu0
    %v969 = vpop.f32.mrb[0].mxu0
    %v970 = vpop.f32.mrb[0].mxu0
    %971 = vdwg.mxu0
    %v972 = vadd.f32 %v786, %v967
    %v973 = vpack.c.bf16 %v972, %v972
    %v974 = vld [vmem:[%s8] sm:$0xf]
    %v975 = vld [vmem:[%s8 + $0x4] sm:$0xf]
    %v976 = vld [vmem:[%s8 + $0x8] sm:$0xf]
    %v977 = vld [vmem:[%s8 + $0xc] sm:$0xf]
    %v978 = vld [vmem:[%s8 + $0x10] sm:$0xf]
    %v979 = vld [vmem:[%s8 + $0x14] sm:$0xf]
    %v980 = vld [vmem:[%s8 + $0x18] sm:$0xf]
    %v981 = vld [vmem:[%s8 + $0x1c] sm:$0xf]
    %v982 = vld [vmem:[%s8 + $0x20] sm:$0xf]
    %v983 = vld [vmem:[%s8 + $0x24] sm:$0xf]
    %v984 = vld [vmem:[%s8 + $0x28] sm:$0xf]
    %v985 = vld [vmem:[%s8 + $0x2c] sm:$0xf]
    %v986 = vld [vmem:[%s8 + $0x30] sm:$0xf]
    %v987 = vld [vmem:[%s8 + $0x34] sm:$0xf]
    %v988 = vld [vmem:[%s8 + $0x38] sm:$0xf]
    %v989 = vld [vmem:[%s8 + $0x3c] sm:$0xf]
    %v990 = vld [vmem:[%s9] sm:$0x1]
    %v992 = vlaneseq
    %v993 = vshrl.u32 %v992, 7
    %v994 = vsub.s32 0, %v993
    %v995 = vrot.slane %v990, %v994
    %v1013 = vunpack.c.l.b16 %v974
    %v1014 = vunpack.c.l.b16 %v975
    %v1015 = vunpack.c.l.b16 %v976
    %v1016 = vunpack.c.l.b16 %v977
    %v1017 = vunpack.c.l.b16 %v978
    %v1018 = vunpack.c.l.b16 %v979
    %v1019 = vunpack.c.l.b16 %v980
    %v1020 = vunpack.c.l.b16 %v981
    %v1021 = vunpack.c.l.b16 %v982
    %v1022 = vunpack.c.l.b16 %v983
    %v1023 = vunpack.c.l.b16 %v984
    %v1024 = vunpack.c.l.b16 %v985
    %v1025 = vunpack.c.l.b16 %v986
    %v1026 = vunpack.c.l.b16 %v987
    %v1027 = vunpack.c.l.b16 %v988
    %v1028 = vunpack.c.l.b16 %v989
    %v1029 = vpack.c.b16 %v1014, %v1013
    %v1030 = vpack.c.b16 %v1016, %v1015
    %v1031 = vpack.c.b16 %v1018, %v1017
    %v1032 = vpack.c.b16 %v1020, %v1019
    %v1033 = vpack.c.b16 %v1022, %v1021
    %v1034 = vpack.c.b16 %v1024, %v1023
    %v1035 = vpack.c.b16 %v1026, %v1025
    %v1036 = vpack.c.b16 %v1028, %v1027
    %1045 = vmatprep.subr.bf16.mxu0 0
    %1046 = vmatpush1.bf16.msra.mxu0 %v1029
    %1047 = vmatprep.subr.bf16.mxu0 0
    %1048 = vmatpush1.bf16.msra.mxu0 %v1030
    %1049 = vmatprep.subr.bf16.mxu0 0
    %1050 = vmatpush1.bf16.msra.mxu0 %v1031
    %1051 = vmatprep.subr.bf16.mxu0 0
    %1052 = vmatpush1.bf16.msra.mxu0 %v1032
    %1053 = vmatprep.subr.bf16.mxu0 0
    %1054 = vmatpush1.bf16.msra.mxu0 %v1033
    %1055 = vmatprep.subr.bf16.mxu0 0
    %1056 = vmatpush1.bf16.msra.mxu0 %v1034
    %1057 = vmatprep.subr.bf16.mxu0 0
    %1058 = vmatpush1.bf16.msra.mxu0 %v1035
    %1059 = vmatprep.subr.bf16.mxu0 0
    %1060 = vmatpush1.bf16.msra.mxu0 %v1036
    %1061 = vmatprep.subr.bf16.mxu0 0
    %1062 = vmatpush1.bf16.msra.mxu0 0
    %1063 = vmatprep.subr.bf16.mxu0 0
    %1064 = vmatpush1.bf16.msra.mxu0 0
    %1065 = vmatprep.subr.bf16.mxu0 0
    %1066 = vmatpush1.bf16.msra.mxu0 0
    %1067 = vmatprep.subr.bf16.mxu0 0
    %1068 = vmatpush1.bf16.msra.mxu0 0
    %1069 = vmatprep.subr.bf16.mxu0 0
    %1070 = vmatpush1.bf16.msra.mxu0 0
    %1071 = vmatprep.subr.bf16.mxu0 0
    %1072 = vmatpush1.bf16.msra.mxu0 0
    %1073 = vmatprep.subr.bf16.mxu0 0
    %1074 = vmatpush1.bf16.msra.mxu0 0
    %1075 = vmatprep.subr.bf16.mxu0 0
    %1076 = vmatpush1.bf16.msra.mxu0 0
    %1077 = vmatprep.mubr.bf16.mxu0 0
    %1078 = vmatmul.mubr.bf16.gmra.mrb[0].mxu0 %v973
    %v1079 = vpop.f32.mrb[0].mxu0
    %v1080 = vadd.f32 %v995, %v1079
    %v1081 = vpop.f32.mrb[0].mxu0
    %v1082 = vpop.f32.mrb[0].mxu0
    %v1083 = vpop.f32.mrb[0].mxu0
    %1084 = vdwg.mxu0
    %vm1085 = vcmask 1041408
    %v1086 = vsel %vm1085, %v1080, -inf
    %1087 = vmax.xlane.f32.xlu0 %v1086
    %v1088 = vpop.xlane.xlu0 %1087
    %v1089 = vsub.f32 %v1080, %v1088
    %v1090 = vmul.f32 %v1089, 1.442695
    %v1091 = vpow.pop %v1090
    %v1092 = vsel %vm1085, %v1091, 0.0
    %1093 = vadd.xlane.f32.xlu0 %v1092
    %v1094 = vpop.xlane.xlu0 %1093
    %v1095 = vlog2.pop %v1094
    %v1096 = vmul.f32 %v1095, 0.6931472
    %v1097 = vadd.f32 %v1088, %v1096
    %v1098 = vlaneseq
    %v1099 = vand.u32 %v1098, 127
    %v1100 = vld [vmem:[%s1] sm:$0x3]
    %1101 = vset.pattern.permute.xlu0 0
    %1102 = vperm.xlu0 %1101, %v1100
    %v1103 = vpop.permute.xlu0 %1102
    %vm1104 = vcmp.eq.s32.totalorder %v1099, %v1103
    %v1105 = vsel %vm1104, %v1080, 0.0
    %v1106 = vsel %vm1085, %v1105, 0.0
    %1107 = vadd.xlane.f32.xlu0 %v1106
    %v1108 = vpop.xlane.xlu0 %1107
    %v1109 = vsub.f32 %v1097, %v1108
    %vm1110 = vcmp.eq.s32.totalorder %v1099, 127
    %v1111 = vsel %vm1110, %v1109, %v1080
    %1112 = vst [vmem:[#allocation5] sm:$0x3] %v972
    %1113 = vst [vmem:[%s11] sm:$0x3] %v1111
    // Predicated region
    $region46: #{_forward_impl.1} parent=1 // pred_check
      _
    $region47: #{_forward_impl.1} parent=1 // pred_check_branch
      %1115 = sbr.rel (0) target = $region49
    $region48: #{_forward_impl.1} parent=1 // pred_region
      %s1117 = ssub.s32 32, 32
      %1118 = vsyncadd [#allocation4], %s1117
      %s1120 = sshll.u32 [#allocation5], 4
      %s1121 = int_to_ptr.vmem [resolvable:$true] %s1120
      %1123 = dma.vmem_to_hbm [thread:$0]  %s1121, 32, %s10, [#allocation4]
    $region49: #{_forward_impl.1} parent=1 // pred_fallthru
      _
    // Predicated region
    $region50: #{_forward_impl.1} parent=1 // pred_check
      _
    $region51: #{_forward_impl.1} parent=1 // pred_check_branch
      %1125 = sbr.rel (0) target = $region53
    $region52: #{_forward_impl.1} parent=1 // pred_region
      _
    $region53: #{_forward_impl.1} parent=1 // pred_fallthru
      _
    // Predicated region
    $region54: #{_forward_impl.1} parent=1 // pred_check
      _
    $region55: #{_forward_impl.1} parent=1 // pred_check_branch
      %1127 = sbr.rel (0) target = $region57
    $region56: #{_forward_impl.1} parent=1 // pred_region
      %1128 = dma.done [#allocation4], 32
    $region57: #{_forward_impl.1} parent=1 // pred_fallthru
      _
    // Predicated region
    $region58: #{_forward_impl.1} parent=1 // pred_check
      _
    $region59: #{_forward_impl.1} parent=1 // pred_check_branch
      %1130 = sbr.rel (0) target = $region61
    $region60: #{_forward_impl.1} parent=1 // pred_region
      _
    $region61: #{_forward_impl.1} parent=1 // pred_fallthru
      _
    %1131 = vsyncpa [#allocation3], 1
    %1132 = vsyncpa [#allocation4], 1

</llo_original>
